<compile_context>
chip_gen: v6e
topology: v6e:2x2x1
jax: 0.10.0
libtpu: 0.0.40
codegen_flags: <defaults>
</compile_context>

<pallas_src>
import jax
import jax.numpy as jnp
from jax.experimental import pallas as pl
from jax.experimental.pallas import tpu as pltpu

HIDDEN = 30
HIDDEN_PAD = 32  # next multiple of 8 (sublane granularity)


def cnet_kernel(x_ref, w_ref, b_ref, wo_ref, bo_ref, out_ref):
    # Fused first layer (fcs + fca), batch on the lane axis:
    #   h[H, TB] = relu(W[H, Din] @ x[Din, TB] + b[H, 1])
    h = jnp.dot(w_ref[...], x_ref[...], preferred_element_type=jnp.float32)
    h = jnp.maximum(h + b_ref[...], 0.0)
    # Output layer (hidden -> 1): the N=1 matmul is replaced by a VPU
    # broadcast-multiply + cross-sublane (XLU) reduction; result is a
    # lane-dense [1, TB] row.
    q = jnp.sum(h * wo_ref[...], axis=0, keepdims=True) + bo_ref[...]
    out_ref[...] = q.astype(out_ref.dtype)


def fuse_params(ws, bs, wa, ba, wo, bo, *, dtype=jnp.float32):
    """Fold the three Linear layers into kernel-friendly tensors (done once).

    Inputs use the [in, out] convention (transposed vs PyTorch):
      ws [s_dim, 30], bs [30], wa [a_dim, 30], ba [30], wo [30, 1], bo [1]
    Returns:
      w_t    [HIDDEN_PAD, s_dim + a_dim]  fused fcs/fca weight, hidden-major
      b_col  [HIDDEN_PAD, 1]              fused bias  bs + ba
      wo_col [HIDDEN_PAD, 1]              output-layer weight
      bo11   [1, 1]                       output-layer bias
    Use dtype=jnp.bfloat16 on v6e/v7x at large batch (accumulation stays f32).
    """
    hidden = ws.shape[1]
    pad_h = HIDDEN_PAD - hidden
    w_t = jnp.pad(jnp.concatenate([ws, wa], axis=0).T, ((0, pad_h), (0, 0)))
    b_col = jnp.pad((bs + ba).reshape(hidden, 1), ((0, pad_h), (0, 0)))
    wo_col = jnp.pad(wo.reshape(hidden, 1), ((0, pad_h), (0, 0)))
    bo11 = bo.reshape(1, 1)
    return (w_t.astype(dtype), b_col.astype(jnp.float32),
            wo_col.astype(jnp.float32), bo11.astype(jnp.float32))


def _round_up(x, m):
    return ((x + m - 1) // m) * m


def cnet_forward(s, a, fused_params, *, tile_b=512):
    """s: [B, s_dim], a: [B, a_dim]  ->  q: [B, 1] float32."""
    w_t, b_col, wo_col, bo11 = fused_params
    B = s.shape[0]
    din = s.shape[1] + a.shape[1]

    # Fused input, batch on the lane axis: [Din, B].
    x_t = jnp.concatenate([s, a], axis=1).astype(w_t.dtype).T

    # Batch tiling: lane-axis block must be a multiple of 128 (or the full dim).
    tb = min(_round_up(tile_b, 128), _round_up(B, 128))
    b_pad = _round_up(B, tb)
    if b_pad != B:
        x_t = jnp.pad(x_t, ((0, 0), (0, b_pad - B)))
    grid = (b_pad // tb,)

    out = pl.pallas_call(
        cnet_kernel,
        out_shape=jax.ShapeDtypeStruct((1, b_pad), jnp.float32),
        grid=grid,
        in_specs=[
            pl.BlockSpec((din, tb), lambda i: (0, i)),     # x tile (streamed)
            pl.BlockSpec(w_t.shape, lambda i: (0, 0)),     # fused weight (VMEM-resident)
            pl.BlockSpec(b_col.shape, lambda i: (0, 0)),   # fused bias   (resident)
            pl.BlockSpec(wo_col.shape, lambda i: (0, 0)),  # out weight   (resident)
            pl.BlockSpec(bo11.shape, lambda i: (0, 0)),    # out bias     (resident)
        ],
        out_specs=pl.BlockSpec((1, tb), lambda i: (0, i)),  # lane-dense q row
        compiler_params=pltpu.CompilerParams(
            dimension_semantics=("parallel",),  # shard batch tiles across TCs (v7x)
        ),
    )(x_t, w_t, b_col, wo_col, bo11)

    return out[0, :B].reshape(B, 1)


def init_params(key, s_dim, a_dim, hidden=HIDDEN):
    """Deterministic init mirroring the module shapes.

    PyTorch: weight.data.normal_(0, 0.1); weights are [out, in] -> stored here
    transposed as [in, out].  Biases use small deterministic values (PyTorch's
    default uniform bias init is not replicated; does not affect kernel math).
    """
    k1, k2, k3, k4, k5, k6 = jax.random.split(key, 6)
    ws = 0.1 * jax.random.normal(k1, (s_dim, hidden), jnp.float32)
    bs = 0.1 * jax.random.normal(k2, (hidden,), jnp.float32)
    wa = 0.1 * jax.random.normal(k3, (a_dim, hidden), jnp.float32)
    ba = 0.1 * jax.random.normal(k4, (hidden,), jnp.float32)
    wo = 0.1 * jax.random.normal(k5, (hidden, 1), jnp.float32)
    bo = 0.1 * jax.random.normal(k6, (1,), jnp.float32)
    return ws, bs, wa, ba, wo, bo


if __name__ == "__main__":
    B, S_DIM, A_DIM = 2, 16, 4

    key = jax.random.PRNGKey(0)
    ks, ka, kp = jax.random.split(key, 3)

    s = jax.random.normal(ks, (B, S_DIM), jnp.float32)
    a = jax.random.normal(ka, (B, A_DIM), jnp.float32)
    raw = init_params(kp, S_DIM, A_DIM)
    params = fuse_params(*raw)  # dtype=jnp.bfloat16 on v6e/v7x at large batch

    q = cnet_forward(s, a, params)
    jax.block_until_ready(q)

    # Pure-JAX reference (full-precision dots) for a sanity check.
    ws, bs, wa, ba, wo, bo = raw
    hp = jax.lax.Precision.HIGHEST
    net = jnp.maximum(jnp.dot(s, ws, precision=hp) + bs
                      + jnp.dot(a, wa, precision=hp) + ba, 0.0)
    ref = jnp.dot(net, wo, precision=hp) + bo

    assert q.shape == (B, 1)
    assert jnp.allclose(q, ref, atol=1e-4, rtol=1e-4), (q, ref)

    print("KERNEL_OK")
</pallas_src>

<mosaic_0001>
module attributes {stable_mosaic.version = 11 : i64} {
  func.func @cnet_kernel(%arg0: i32, %arg1: memref<20x128xf32, #tpu.memory_space<vmem>>, %arg2: memref<32x20xf32, #tpu.memory_space<vmem>>, %arg3: memref<32x1xf32, #tpu.memory_space<vmem>>, %arg4: memref<32x1xf32, #tpu.memory_space<vmem>>, %arg5: memref<1x1xf32, #tpu.memory_space<vmem>>, %arg6: memref<1x128xf32, #tpu.memory_space<vmem>>) attributes {dimension_semantics = [#tpu.dimension_semantics<parallel>], iteration_bounds = array<i64: 1>, scalar_prefetch = 0 : i64, scratch_operands = 0 : i64, tpu.core_type = #tpu.core_type<tc>, window_params = [{transform_indices = @transform_0, window_bounds = array<i64: 20, 128>}, {pipeline_mode = #tpu.pipeline_mode<synchronous>, transform_indices = @transform_1, window_bounds = array<i64: 32, 20>}, {pipeline_mode = #tpu.pipeline_mode<synchronous>, transform_indices = @transform_2, window_bounds = array<i64: 32, 1>}, {pipeline_mode = #tpu.pipeline_mode<synchronous>, transform_indices = @transform_3, window_bounds = array<i64: 32, 1>}, {pipeline_mode = #tpu.pipeline_mode<synchronous>, transform_indices = @transform_4, window_bounds = array<i64: 1, 1>}, {transform_indices = @transform_5, window_bounds = array<i64: 1, 128>}]} {
    %c0 = arith.constant 0 : index
    %c0_0 = arith.constant 0 : index
    %0 = vector.load %arg2[%c0, %c0_0] : memref<32x20xf32, #tpu.memory_space<vmem>>, vector<32x20xf32>
    %c0_1 = arith.constant 0 : index
    %c0_2 = arith.constant 0 : index
    %1 = vector.load %arg1[%c0_1, %c0_2] : memref<20x128xf32, #tpu.memory_space<vmem>>, vector<20x128xf32>
    %cst = arith.constant dense<0.000000e+00> : vector<32x128xf32>
    %2 = tpu.matmul %0, %1, %cst {dimension_numbers = #tpu.dot_dimension_numbers<[1], [0], [0], [1], [0, 0, 1, 1], [], []>} : vector<32x20xf32>, vector<20x128xf32>, vector<32x128xf32> -> vector<32x128xf32>
    %c0_3 = arith.constant 0 : index
    %c0_4 = arith.constant 0 : index
    %3 = vector.load %arg3[%c0_3, %c0_4] : memref<32x1xf32, #tpu.memory_space<vmem>>, vector<32x1xf32>
    %4 = vector.broadcast %3 : vector<32x1xf32> to vector<32x128xf32>
    %5 = arith.addf %2, %4 : vector<32x128xf32>
    %cst_5 = arith.constant 0.000000e+00 : f32
    %6 = vector.broadcast %cst_5 : f32 to vector<32x128xf32>
    %7 = arith.maximumf %5, %6 : vector<32x128xf32>
    %c0_6 = arith.constant 0 : index
    %c0_7 = arith.constant 0 : index
    %8 = vector.load %arg4[%c0_6, %c0_7] : memref<32x1xf32, #tpu.memory_space<vmem>>, vector<32x1xf32>
    %9 = vector.broadcast %8 : vector<32x1xf32> to vector<32x128xf32>
    %10 = arith.mulf %7, %9 : vector<32x128xf32>
    %cst_8 = arith.constant dense<0.000000e+00> : vector<128xf32>
    %11 = vector.multi_reduction <add>, %10, %cst_8 [0] : vector<32x128xf32> to vector<128xf32>
    %12 = vector.shape_cast %11 : vector<128xf32> to vector<1x128xf32>
    %c0_9 = arith.constant 0 : index
    %c0_10 = arith.constant 0 : index
    %13 = vector.load %arg5[%c0_9, %c0_10] : memref<1x1xf32, #tpu.memory_space<vmem>>, vector<1x1xf32>
    %14 = vector.broadcast %13 : vector<1x1xf32> to vector<1x128xf32>
    %15 = arith.addf %12, %14 : vector<1x128xf32>
    %c0_11 = arith.constant 0 : index
    %c0_12 = arith.constant 0 : index
    %16 = vector.load %arg6[%c0_11, %c0_12] : memref<1x128xf32, #tpu.memory_space<vmem>>, vector<1x128xf32>
    tpu.vector_store %arg6[%c0_11, %c0_12], %15 {strides = array<i32>} : memref<1x128xf32, #tpu.memory_space<vmem>>, vector<1x128xf32>,
    return
  }
  func.func @transform_0(%arg0: i32) -> (i32, i32) {
    %c0_i32 = arith.constant 0 : i32
    %c0_i32_0 = arith.constant 0 : i32
    return %c0_i32, %arg0 : i32, i32
  }
  func.func @transform_1(%arg0: i32) -> (i32, i32) {
    %c0_i32 = arith.constant 0 : i32
    %c0_i32_0 = arith.constant 0 : i32
    %c0_i32_1 = arith.constant 0 : i32
    return %c0_i32, %c0_i32_0 : i32, i32
  }
  func.func @transform_2(%arg0: i32) -> (i32, i32) {
    %c0_i32 = arith.constant 0 : i32
    %c0_i32_0 = arith.constant 0 : i32
    %c0_i32_1 = arith.constant 0 : i32
    return %c0_i32, %c0_i32_0 : i32, i32
  }
  func.func @transform_3(%arg0: i32) -> (i32, i32) {
    %c0_i32 = arith.constant 0 : i32
    %c0_i32_0 = arith.constant 0 : i32
    %c0_i32_1 = arith.constant 0 : i32
    return %c0_i32, %c0_i32_0 : i32, i32
  }
  func.func @transform_4(%arg0: i32) -> (i32, i32) {
    %c0_i32 = arith.constant 0 : i32
    %c0_i32_0 = arith.constant 0 : i32
    %c0_i32_1 = arith.constant 0 : i32
    return %c0_i32, %c0_i32_0 : i32, i32
  }
  func.func @transform_5(%arg0: i32) -> (i32, i32) {
    %c0_i32 = arith.constant 0 : i32
    %c0_i32_0 = arith.constant 0 : i32
    return %c0_i32, %arg0 : i32, i32
  }
}

</mosaic_0001>

<llo_original>
// kernel: tpu_custom_call.1
$region0: #{tpu_custom_call.1}
  #allocation0 [shape = 'u32[]', space=smem, size = 0x4, offset = 0x4, fixed_abs, tag = 'smem constant byte address 0x4 - core index']
  #allocation1 [shape = 'u32[144,128]{1,0:T(1,128)}', space=vmem, size = 0x12000, scoped, tag = 'internal scratch']
  #allocation2 [shape = 'f32[1,1]{1,0:T(1,128)S(1)}', space=vmem, size = 0x200, scoped, tag = 'scoped memory for tpu_custom_call.1']
  %s0 = inlined_call_operand.vmem [shape: f32[20,128], index: 0, kind: input, shape index: {}]
  %s1 = inlined_call_operand.vmem [shape: f32[32,20], index: 1, kind: input, shape index: {}]
  %s2 = inlined_call_operand.vmem [shape: f32[32,1], index: 2, kind: input, shape index: {}]
  %s3 = inlined_call_operand.vmem [shape: f32[32,1], index: 3, kind: input, shape index: {}]
  %s4 = inlined_call_operand.<no memory space> [shape: f32[1,1], index: 4, kind: input, shape index: {}]
  %s5 = inlined_call_operand.hbm [shape: f32[1,128], index: 5, kind: output, shape index: {}]
  %s6 = sld [smem:[#allocation0]]
  $region30: #{tpu_custom_call.1} parent=0
    _
  %s8 = ssub.s32 1, %s6
  %s9 = scalar_select 0, %s8, %s6
  %v10 = vstv %s4
  %11 = vst [vmem:[#allocation2] sm:$0x1] %v10
  $region1: #{tpu_custom_call.1} parent=0
    #allocation3 [shape = 'u8[512]{0}', space=vmem, size = 0x400, scoped, tag = 'output window, operand 0, single buffered']
    #allocation4 [shape = 's32[1]{0}', space=sflag, size = 0x4, scoped, tag = 'scoped memory for tpu_custom_call.1']
    %12 = vsyncpa [#allocation4], 0
    // Predicated region
    $region2: #{tpu_custom_call.1} parent=1 // pred_check
      _
    $region3: #{tpu_custom_call.1} parent=1 // pred_check_branch
      %14 = sbr.rel (0) target = $region5
    $region4: #{tpu_custom_call.1} parent=1 // pred_region
      _
    $region5: #{tpu_custom_call.1} parent=1 // pred_fallthru
      _
    // Predicated region
    $region6: #{tpu_custom_call.1} parent=1 // pred_check
      _
    $region7: #{tpu_custom_call.1} parent=1 // pred_check_branch
      %16 = sbr.rel (0) target = $region9
    $region8: #{tpu_custom_call.1} parent=1 // pred_region
      _
    $region9: #{tpu_custom_call.1} parent=1 // pred_fallthru
      _
    // Predicated region
    $region10: #{tpu_custom_call.1} parent=1 // pred_check
      _
    $region11: #{tpu_custom_call.1} parent=1 // pred_check_branch
      %18 = sbr.rel (0) target = $region13
    $region12: #{tpu_custom_call.1} parent=1 // pred_region
      _
    $region13: #{tpu_custom_call.1} parent=1 // pred_fallthru
      _
    // Predicated region
    $region14: #{tpu_custom_call.1} parent=1 // pred_check
      _
    $region15: #{tpu_custom_call.1} parent=1 // pred_check_branch
      %20 = sbr.rel (0) target = $region17
    $region16: #{tpu_custom_call.1} parent=1 // pred_region
      _
    $region17: #{tpu_custom_call.1} parent=1 // pred_fallthru
      _
    // Predicated region
    $region18: #{tpu_custom_call.1} parent=1 // pred_check
      _
    $region19: #{tpu_custom_call.1} parent=1 // pred_check_branch
      %22 = sbr.rel (0) target = $region21
    $region20: #{tpu_custom_call.1} parent=1 // pred_region
      _
    $region21: #{tpu_custom_call.1} parent=1 // pred_fallthru
      _
    %v23 = vld [vmem:[%s1] sm:$0xff]
    %v24 = vld [vmem:[%s1 + $0x8] sm:$0xff]
    %v25 = vld [vmem:[%s1 + $0x10] sm:$0xff]
    %v26 = vld [vmem:[%s1 + $0x18] sm:$0xff]
    %v27 = vld [vmem:[%s0] sm:$0xff]
    %v28 = vld [vmem:[%s0 + $0x8] sm:$0xff]
    %v29 = vld [vmem:[%s0 + $0x10] sm:$0xf]
    %v30 = vld [vmem:[%s2] sm:$0xff]
    %v31 = vld [vmem:[%s2 + $0x8] sm:$0xff]
    %v32 = vld [vmem:[%s2 + $0x10] sm:$0xff]
    %v33 = vld [vmem:[%s2 + $0x18] sm:$0xff]
    %35 = vset.pattern.permute.xlu0 0
    %36 = vperm.xlu0 %35, %v30
    %v37 = vpop.permute.xlu0 %36
    %40 = vset.pattern.permute.xlu0 0
    %41 = vperm.xlu0 %40, %v31
    %v42 = vpop.permute.xlu0 %41
    %45 = vset.pattern.permute.xlu0 0
    %46 = vperm.xlu0 %45, %v32
    %v47 = vpop.permute.xlu0 %46
    %50 = vset.pattern.permute.xlu0 0
    %51 = vperm.xlu0 %50, %v33
    %v52 = vpop.permute.xlu0 %51
    %vm54 = vcmask 162816
    %v56 = vsel %vm54, %v23, 0
    %v59 = vsel %vm54, %v24, 0
    %v62 = vsel %vm54, %v25, 0
    %v65 = vsel %vm54, %v26, 0
    %vm67 = vcmask 1043456
    %v69 = vsel %vm67, %v29, 0
    %71 = vmatprep.subr.mxu0 0.0
    %72 = vmatpush1.msra.mxu0 0.0
    %73 = vmatprep.subr.mxu0 0.0
    %74 = vmatpush1.msra.mxu0 0.0
    %75 = vmatprep.subr.mxu0 0.0
    %76 = vmatpush1.msra.mxu0 0.0
    %77 = vmatprep.subr.mxu0 0.0
    %78 = vmatpush1.msra.mxu0 0.0
    %79 = vmatprep.subr.mxu0 0.0
    %80 = vmatpush1.msra.mxu0 0.0
    %81 = vmatprep.subr.mxu0 0.0
    %82 = vmatpush1.msra.mxu0 0.0
    %83 = vmatprep.subr.mxu0 0.0
    %84 = vmatpush1.msra.mxu0 0.0
    %85 = vmatprep.subr.mxu0 0.0
    %86 = vmatpush1.msra.mxu0 0.0
    %87 = vmatprep.subr.mxu0 0.0
    %88 = vmatpush1.msra.mxu0 0.0
    %89 = vmatprep.subr.mxu0 0.0
    %90 = vmatpush1.msra.mxu0 0.0
    %91 = vmatprep.subr.mxu0 0.0
    %92 = vmatpush1.msra.mxu0 0.0
    %93 = vmatprep.subr.mxu0 0.0
    %94 = vmatpush1.msra.mxu0 0.0
    %95 = vmatprep.subr.mxu0 0.0
    %96 = vmatpush1.msra.mxu0 0.0
    %97 = vmatprep.subr.mxu0 0.0
    %98 = vmatpush1.msra.mxu0 %v69
    %99 = vmatprep.subr.mxu0 0.0
    %100 = vmatpush1.msra.mxu0 %v28
    %101 = vmatprep.subr.mxu0 0.0
    %102 = vmatpush1.msra.mxu0 %v27
    %103 = vmatprep.subr.mxu0 0.0
    %104 = vmatpush2.msra.mxu0 0.0
    %105 = vmatprep.subr.mxu0 0.0
    %106 = vmatpush2.msra.mxu0 0.0
    %107 = vmatprep.subr.mxu0 0.0
    %108 = vmatpush2.msra.mxu0 0.0
    %109 = vmatprep.subr.mxu0 0.0
    %110 = vmatpush2.msra.mxu0 0.0
    %111 = vmatprep.subr.mxu0 0.0
    %112 = vmatpush2.msra.mxu0 0.0
    %113 = vmatprep.subr.mxu0 0.0
    %114 = vmatpush2.msra.mxu0 0.0
    %115 = vmatprep.subr.mxu0 0.0
    %116 = vmatpush2.msra.mxu0 0.0
    %117 = vmatprep.subr.mxu0 0.0
    %118 = vmatpush2.msra.mxu0 0.0
    %119 = vmatprep.subr.mxu0 0.0
    %120 = vmatpush2.msra.mxu0 0.0
    %121 = vmatprep.subr.mxu0 0.0
    %122 = vmatpush2.msra.mxu0 0.0
    %123 = vmatprep.subr.mxu0 0.0
    %124 = vmatpush2.msra.mxu0 0.0
    %125 = vmatprep.subr.mxu0 0.0
    %126 = vmatpush2.msra.mxu0 0.0
    %127 = vmatprep.subr.mxu0 0.0
    %128 = vmatpush2.msra.mxu0 0.0
    %129 = vmatprep.subr.mxu0 0.0
    %130 = vmatpush2.msra.mxu0 0.0
    %131 = vmatprep.subr.mxu0 0.0
    %132 = vmatpush2.msra.mxu0 0.0
    %133 = vmatprep.subr.mxu0 0.0
    %134 = vmatpush2.msra.mxu0 0.0
    %135 = vmatprep.mubr.f32.mxu0 0.0
    %136 = vmatmul.mubr.f32.gmra.mxu0 %v56
    %v137 = vpop.f32.mrf.mxu0
    %v138 = vadd.f32 %v37, %v137
    %v139 = vpop.f32.mrf.mxu0
    %140 = vmatprep.mubr.f32.mxu0 0.0
    %141 = vmatmul.mubr.f32.gmra.mxu0 %v59
    %v142 = vpop.f32.mrf.mxu0
    %v143 = vadd.f32 %v42, %v142
    %v144 = vpop.f32.mrf.mxu0
    %145 = vmatprep.mubr.f32.mxu0 0.0
    %146 = vmatmul.mubr.f32.gmra.mxu0 %v62
    %v147 = vpop.f32.mrf.mxu0
    %v148 = vadd.f32 %v47, %v147
    %v149 = vpop.f32.mrf.mxu0
    %150 = vmatprep.mubr.f32.mxu0 0.0
    %151 = vmatmul.mubr.f32.gmra.mxu0 %v65
    %v152 = vpop.f32.mrf.mxu0
    %v153 = vadd.f32 %v52, %v152
    %v154 = vpop.f32.mrf.mxu0
    %155 = vdwg.mxu0
    %v156 = vmax.f32 %v138, 0.0
    %v157 = vmax.f32 %v143, 0.0
    %v158 = vmax.f32 %v148, 0.0
    %v159 = vmax.f32 %v153, 0.0
    %v160 = vld [vmem:[%s3] sm:$0xff]
    %v161 = vld [vmem:[%s3 + $0x8] sm:$0xff]
    %v162 = vld [vmem:[%s3 + $0x10] sm:$0xff]
    %v163 = vld [vmem:[%s3 + $0x18] sm:$0xff]
    %165 = vset.pattern.permute.xlu0 0
    %166 = vperm.xlu0 %165, %v160
    %v167 = vpop.permute.xlu0 %166
    %170 = vset.pattern.permute.xlu0 0
    %171 = vperm.xlu0 %170, %v161
    %v172 = vpop.permute.xlu0 %171
    %175 = vset.pattern.permute.xlu0 0
    %176 = vperm.xlu0 %175, %v162
    %v177 = vpop.permute.xlu0 %176
    %180 = vset.pattern.permute.xlu0 0
    %181 = vperm.xlu0 %180, %v163
    %v182 = vpop.permute.xlu0 %181
    %v184 = vmul.f32 %v156, %v167
    %v185 = vmul.f32 %v157, %v172
    %v186 = vmul.f32 %v158, %v177
    %v187 = vmul.f32 %v159, %v182
    %v188 = vadd.f32 %v184, %v185
    %v189 = vadd.f32 %v188, %v186
    %v190 = vadd.f32 %v189, %v187
    %v191 = vrot.slane %v190, 4
    %v192 = vadd.f32 %v190, %v191
    %v193 = vrot.slane %v192, 2
    %v194 = vadd.f32 %v192, %v193
    %v195 = vrot.slane %v194, 1
    %v196 = vadd.f32 %v194, %v195
    %v197 = vld [vmem:[#allocation2] sm:$0x1]
    %199 = vset.pattern.permute.xlu0 0
    %200 = vperm.xlu0 %199, %v197
    %v201 = vpop.permute.xlu0 %200
    %v203 = vlaneseq
    %v204 = vshrl.u32 %v203, 7
    %v205 = vsub.s32 0, %v204
    %v206 = vrot.slane %v201, %v205
    %v207 = vadd.f32 %v196, %v206
    %208 = vst [vmem:[#allocation3] sm:$0x1] %v207
    // Predicated region
    $region22: #{tpu_custom_call.1} parent=1 // pred_check
      _
    $region23: #{tpu_custom_call.1} parent=1 // pred_check_branch
      %210 = sbr.rel (0) target = $region25
    $region24: #{tpu_custom_call.1} parent=1 // pred_region
      %s212 = ssub.s32 16, 16
      %213 = vsyncadd [#allocation4], %s212
      %s215 = sshll.u32 [#allocation3], 4
      %s216 = int_to_ptr.vmem [resolvable:$true] %s215
      %218 = dma.vmem_to_hbm [thread:$0]  %s216, 16, %s5, [#allocation4]
    $region25: #{tpu_custom_call.1} parent=1 // pred_fallthru
      _
    // Predicated region
    $region26: #{tpu_custom_call.1} parent=1 // pred_check
      _
    $region27: #{tpu_custom_call.1} parent=1 // pred_check_branch
      %220 = sbr.rel (0) target = $region29
    $region28: #{tpu_custom_call.1} parent=1 // pred_region
      %221 = dma.done [#allocation4], 16
    $region29: #{tpu_custom_call.1} parent=1 // pred_fallthru
      _
    %222 = vsyncpa [#allocation4], 1

</llo_original>
